<compile_context>
chip_gen: v7x
topology: tpu7x:2x2x1
jax: 0.10.0
libtpu: 0.0.40
codegen_flags: <defaults>
</compile_context>

<pallas_src>
import math
import functools

import jax
import jax.numpy as jnp
from jax.experimental import pallas as pl
from jax.experimental.pallas import tpu as pltpu


# ----------------------------------------------------------------------------
# Fused kernel: global avg/max pool + shared MLP + sigmoid + channel rescale
# ----------------------------------------------------------------------------
def _channel_gate_kernel(x_ref, w1t_ref, b1_ref, w2t_ref, b2_ref, o_ref, *,
                         hw, nb):
    # x_ref  : (Nb, C, HW)  -- HW lane-dense, C on sublanes
    # w1t_ref: (C, Ch)      b1_ref: (1, Ch)     (Ch = C // reduction_ratio)
    # w2t_ref: (Ch, C)      b2_ref: (1, C)
    # o_ref  : (Nb, C, HW)
    x = x_ref[...].astype(jnp.float32)                       # (Nb, C, HW)

    # ---- global spatial pooling: reduce over the lane (HW) axis ----
    avg = jnp.sum(x, axis=2) * (1.0 / hw)                    # (Nb, C)
    mx = jnp.max(x, axis=2)                                   # (Nb, C)

    # ---- fused shared MLP over both pooled vectors at once ----
    pooled = jnp.concatenate([avg, mx], axis=0)               # (2*Nb, C)
    h = jnp.dot(pooled, w1t_ref[...],
                preferred_element_type=jnp.float32) + b1_ref[...]  # (2*Nb, Ch)
    h = jnp.maximum(h, 0.0)
    h_sum = h[:nb] + h[nb:]                                   # (Nb, Ch)
    # second Linear is linear, so W2(h_avg)+b2 + W2(h_max)+b2 = W2(h_sum)+2*b2
    att = jnp.dot(h_sum, w2t_ref[...],
                  preferred_element_type=jnp.float32) + 2.0 * b2_ref[...]  # (Nb, C)

    # ---- sigmoid gate (EUP exp) + per-channel rescale (lane broadcast) ----
    scale = 1.0 / (1.0 + jnp.exp(-att))                       # (Nb, C), f32
    # Re-read x from VMEM for the rescale so the full slab is not held live
    # across the MLP (avoids vreg spills for large (Nb, C, HW) blocks).
    o_ref[...] = (x_ref[...].astype(jnp.float32)
                  * scale[:, :, None]).astype(o_ref.dtype)


def _pick_batch_block(n, c, hw, itemsize):
    """Largest batch-block Nb (a divisor of n) whose double-buffered in+out
    slabs fit a conservative VMEM budget, keeping >= 2 parallel grid steps
    when n >= 2 (so v7x's two TensorCores both get work)."""
    budget = 24 * 1024 * 1024                 # bytes; safe on v7x's 64 MiB VMEM
    per_batch_elem = 4 * c * hw * itemsize    # (in + out) x double-buffer
    nb_cap = max(1, budget // per_batch_elem)
    if n >= 2:
        nb_cap = min(nb_cap, max(1, n // 2))  # keep at least 2 grid steps
    nb = 1
    for d in range(1, n + 1):
        if n % d == 0 and d <= nb_cap:
            nb = d
    return nb


def channel_gate_pallas(x, w1, b1, w2, b2):
    """x: (N, C, H, W) (NCHW, as in PyTorch), any float dtype.
    w1: (Ch, C), b1: (Ch,), w2: (C, Ch), b2: (C,) -- PyTorch Linear layout."""
    n, c, h, w = x.shape
    hw = h * w
    ch = w1.shape[0]
    itemsize = jnp.dtype(x.dtype).itemsize

    nb = _pick_batch_block(n, c, hw, itemsize)
    grid = (n // nb,)

    xf = x.reshape(n, c, hw)                      # free reshape, HW contiguous
    w1t = w1.T.astype(jnp.float32)                # (C, Ch)
    w2t = w2.T.astype(jnp.float32)                # (Ch, C)
    b1r = b1.reshape(1, ch).astype(jnp.float32)   # (1, Ch)
    b2r = b2.reshape(1, c).astype(jnp.float32)    # (1, C)

    kernel = functools.partial(_channel_gate_kernel, hw=hw, nb=nb)

    cost = pl.CostEstimate(
        flops=2 * n * c * hw + 12 * n * c * ch,              # pooling + 2 matmuls
        transcendentals=n * c,                               # sigmoid exp
        bytes_accessed=2 * n * c * hw * itemsize             # x in + out
                       + (2 * c * ch + c + ch) * 4,          # weights/biases
    )

    out = pl.pallas_call(
        kernel,
        out_shape=jax.ShapeDtypeStruct((n, c, hw), x.dtype),
        grid=grid,
        in_specs=[
            pl.BlockSpec((nb, c, hw), lambda i: (i, 0, 0)),  # x: Nb batch elems
            pl.BlockSpec((c, ch), lambda i: (0, 0)),         # w1^T (reused)
            pl.BlockSpec((1, ch), lambda i: (0, 0)),         # b1
            pl.BlockSpec((ch, c), lambda i: (0, 0)),         # w2^T (reused)
            pl.BlockSpec((1, c), lambda i: (0, 0)),          # b2
        ],
        out_specs=pl.BlockSpec((nb, c, hw), lambda i: (i, 0, 0)),
        compiler_params=pltpu.CompilerParams(
            dimension_semantics=("parallel",),
            vmem_limit_bytes=32 * 1024 * 1024,
        ),
        cost_estimate=cost,
    )(xf, w1t, b1r, w2t, b2r)

    return out.reshape(n, c, h, w)


# ----------------------------------------------------------------------------
# Pure-JAX reference (mirrors the PyTorch ChannelGate forward)
# ----------------------------------------------------------------------------
def channel_gate_ref(x, w1, b1, w2, b2):
    n, c, h, w = x.shape
    xf = x.reshape(n, c, h * w)
    avg = jnp.mean(xf, axis=2)                                # (N, C)
    mx = jnp.max(xf, axis=2)                                  # (N, C)

    def mlp(p):                                               # p: (N, C)
        hid = jnp.maximum(p @ w1.T + b1, 0.0)                 # (N, Ch)
        return hid @ w2.T + b2                                # (N, C)

    att = mlp(avg) + mlp(mx)
    scale = jax.nn.sigmoid(att)                               # (N, C)
    return x * scale[:, :, None, None]


# ----------------------------------------------------------------------------
if __name__ == "__main__":
    # Small shapes consistent with the module: gate_channels=64, reduction=16.
    N, C, H, W = 2, 64, 16, 16
    reduction_ratio = 16
    Ch = C // reduction_ratio

    key = jax.random.PRNGKey(0)
    kx, k1, k2, k3, k4 = jax.random.split(key, 5)
    x = jax.random.normal(kx, (N, C, H, W), jnp.float32)

    # PyTorch nn.Linear default init: U(-1/sqrt(fan_in), 1/sqrt(fan_in))
    bound1 = 1.0 / math.sqrt(C)
    w1 = jax.random.uniform(k1, (Ch, C), jnp.float32, -bound1, bound1)
    b1 = jax.random.uniform(k2, (Ch,), jnp.float32, -bound1, bound1)
    bound2 = 1.0 / math.sqrt(Ch)
    w2 = jax.random.uniform(k3, (C, Ch), jnp.float32, -bound2, bound2)
    b2 = jax.random.uniform(k4, (C,), jnp.float32, -bound2, bound2)

    out = jax.block_until_ready(channel_gate_pallas(x, w1, b1, w2, b2))
    assert out.shape == (N, C, H, W)

    ref = jax.block_until_ready(channel_gate_ref(x, w1, b1, w2, b2))
    max_err = float(jnp.max(jnp.abs(out - ref)))
    assert jnp.allclose(out, ref, atol=1e-4, rtol=1e-4), max_err

    print("KERNEL_OK")
</pallas_src>

<mosaic_0001>
module attributes {stable_mosaic.version = 11 : i64} {
  func.func @_channel_gate_kernel(%arg0: i32, %arg1: memref<1x64x256xf32, #tpu.memory_space<vmem>>, %arg2: memref<64x4xf32, #tpu.memory_space<vmem>>, %arg3: memref<1x4xf32, #tpu.memory_space<vmem>>, %arg4: memref<4x64xf32, #tpu.memory_space<vmem>>, %arg5: memref<1x64xf32, #tpu.memory_space<vmem>>, %arg6: memref<1x64x256xf32, #tpu.memory_space<vmem>>) attributes {dimension_semantics = [#tpu.dimension_semantics<parallel>], iteration_bounds = array<i64: 2>, scalar_prefetch = 0 : i64, scratch_operands = 0 : i64, tpu.core_type = #tpu.core_type<tc>, window_params = [{transform_indices = @transform_0, window_bounds = array<i64: 1, 64, 256>}, {pipeline_mode = #tpu.pipeline_mode<synchronous>, transform_indices = @transform_1, window_bounds = array<i64: 64, 4>}, {pipeline_mode = #tpu.pipeline_mode<synchronous>, transform_indices = @transform_2, window_bounds = array<i64: 1, 4>}, {pipeline_mode = #tpu.pipeline_mode<synchronous>, transform_indices = @transform_3, window_bounds = array<i64: 4, 64>}, {pipeline_mode = #tpu.pipeline_mode<synchronous>, transform_indices = @transform_4, window_bounds = array<i64: 1, 64>}, {transform_indices = @transform_5, window_bounds = array<i64: 1, 64, 256>}]} {
    %c0 = arith.constant 0 : index
    %c0_0 = arith.constant 0 : index
    %c0_1 = arith.constant 0 : index
    %0 = vector.load %arg1[%c0, %c0_0, %c0_1] : memref<1x64x256xf32, #tpu.memory_space<vmem>>, vector<1x64x256xf32>
    %cst = arith.constant dense<0.000000e+00> : vector<1x64xf32>
    %1 = vector.multi_reduction <add>, %0, %cst [2] : vector<1x64x256xf32> to vector<1x64xf32>
    %cst_2 = arith.constant 3.906250e-03 : f32
    %2 = vector.broadcast %cst_2 : f32 to vector<1x64xf32>
    %3 = arith.mulf %1, %2 : vector<1x64xf32>
    %cst_3 = arith.constant dense<0xFF800000> : vector<1x64xf32>
    %4 = vector.multi_reduction <maximumf>, %0, %cst_3 [2] : vector<1x64x256xf32> to vector<1x64xf32>
    %5 = tpu.concatenate %3, %4 in 0 : vector<1x64xf32>, vector<1x64xf32> -> vector<2x64xf32>
    %c0_4 = arith.constant 0 : index
    %c0_5 = arith.constant 0 : index
    %6 = vector.load %arg2[%c0_4, %c0_5] : memref<64x4xf32, #tpu.memory_space<vmem>>, vector<64x4xf32>
    %cst_6 = arith.constant dense<0.000000e+00> : vector<2x4xf32>
    %7 = tpu.matmul %5, %6, %cst_6 {dimension_numbers = #tpu.dot_dimension_numbers<[1], [0], [0], [1], [0, 0, 1, 1], [], []>} : vector<2x64xf32>, vector<64x4xf32>, vector<2x4xf32> -> vector<2x4xf32>
    %c0_7 = arith.constant 0 : index
    %c0_8 = arith.constant 0 : index
    %8 = vector.load %arg3[%c0_7, %c0_8] : memref<1x4xf32, #tpu.memory_space<vmem>>, vector<1x4xf32>
    %9 = vector.broadcast %8 : vector<1x4xf32> to vector<2x4xf32>
    %10 = arith.addf %7, %9 : vector<2x4xf32>
    %cst_9 = arith.constant 0.000000e+00 : f32
    %11 = vector.broadcast %cst_9 : f32 to vector<2x4xf32>
    %12 = arith.maximumf %10, %11 : vector<2x4xf32>
    %13 = vector.extract_strided_slice %12 {offsets = [0, 0], sizes = [1, 4], strides = [1, 1]} : vector<2x4xf32> to vector<1x4xf32>
    %14 = vector.extract_strided_slice %12 {offsets = [1, 0], sizes = [1, 4], strides = [1, 1]} : vector<2x4xf32> to vector<1x4xf32>
    %15 = arith.addf %13, %14 : vector<1x4xf32>
    %c0_10 = arith.constant 0 : index
    %c0_11 = arith.constant 0 : index
    %16 = vector.load %arg4[%c0_10, %c0_11] : memref<4x64xf32, #tpu.memory_space<vmem>>, vector<4x64xf32>
    %cst_12 = arith.constant dense<0.000000e+00> : vector<1x64xf32>
    %17 = tpu.matmul %15, %16, %cst_12 {dimension_numbers = #tpu.dot_dimension_numbers<[1], [0], [0], [1], [0, 0, 1, 1], [], []>} : vector<1x4xf32>, vector<4x64xf32>, vector<1x64xf32> -> vector<1x64xf32>
    %c0_13 = arith.constant 0 : index
    %c0_14 = arith.constant 0 : index
    %18 = vector.load %arg5[%c0_13, %c0_14] : memref<1x64xf32, #tpu.memory_space<vmem>>, vector<1x64xf32>
    %cst_15 = arith.constant 2.000000e+00 : f32
    %19 = vector.broadcast %cst_15 : f32 to vector<1x64xf32>
    %20 = arith.mulf %19, %18 : vector<1x64xf32>
    %21 = arith.addf %17, %20 : vector<1x64xf32>
    %cst_16 = arith.constant 0.000000e+00 : f32
    %22 = vector.broadcast %cst_16 : f32 to vector<1x64xf32>
    %23 = arith.subf %22, %21 : vector<1x64xf32>
    %24 = math.exp %23 : vector<1x64xf32>
    %cst_17 = arith.constant 1.000000e+00 : f32
    %25 = vector.broadcast %cst_17 : f32 to vector<1x64xf32>
    %26 = arith.addf %25, %24 : vector<1x64xf32>
    %cst_18 = arith.constant 1.000000e+00 : f32
    %27 = vector.broadcast %cst_18 : f32 to vector<1x64xf32>
    %28 = arith.divf %27, %26 : vector<1x64xf32>
    %c0_19 = arith.constant 0 : index
    %c0_20 = arith.constant 0 : index
    %c0_21 = arith.constant 0 : index
    %29 = vector.load %arg1[%c0_19, %c0_20, %c0_21] : memref<1x64x256xf32, #tpu.memory_space<vmem>>, vector<1x64x256xf32>
    %30 = vector.shape_cast %28 : vector<1x64xf32> to vector<1x64x1xf32>
    %31 = vector.broadcast %30 : vector<1x64x1xf32> to vector<1x64x256xf32>
    %32 = arith.mulf %29, %31 : vector<1x64x256xf32>
    %c0_22 = arith.constant 0 : index
    %c0_23 = arith.constant 0 : index
    %c0_24 = arith.constant 0 : index
    %33 = vector.load %arg6[%c0_22, %c0_23, %c0_24] : memref<1x64x256xf32, #tpu.memory_space<vmem>>, vector<1x64x256xf32>
    tpu.vector_store %arg6[%c0_22, %c0_23, %c0_24], %32 {strides = array<i32>} : memref<1x64x256xf32, #tpu.memory_space<vmem>>, vector<1x64x256xf32>,
    return
  }
  func.func @transform_0(%arg0: i32) -> (i32, i32, i32) {
    %c0_i32 = arith.constant 0 : i32
    %c0_i32_0 = arith.constant 0 : i32
    %c0_i32_1 = arith.constant 0 : i32
    return %arg0, %c0_i32, %c0_i32_0 : i32, i32, i32
  }
  func.func @transform_1(%arg0: i32) -> (i32, i32) {
    %c0_i32 = arith.constant 0 : i32
    %c0_i32_0 = arith.constant 0 : i32
    %c0_i32_1 = arith.constant 0 : i32
    return %c0_i32, %c0_i32_0 : i32, i32
  }
  func.func @transform_2(%arg0: i32) -> (i32, i32) {
    %c0_i32 = arith.constant 0 : i32
    %c0_i32_0 = arith.constant 0 : i32
    %c0_i32_1 = arith.constant 0 : i32
    return %c0_i32, %c0_i32_0 : i32, i32
  }
  func.func @transform_3(%arg0: i32) -> (i32, i32) {
    %c0_i32 = arith.constant 0 : i32
    %c0_i32_0 = arith.constant 0 : i32
    %c0_i32_1 = arith.constant 0 : i32
    return %c0_i32, %c0_i32_0 : i32, i32
  }
  func.func @transform_4(%arg0: i32) -> (i32, i32) {
    %c0_i32 = arith.constant 0 : i32
    %c0_i32_0 = arith.constant 0 : i32
    %c0_i32_1 = arith.constant 0 : i32
    return %c0_i32, %c0_i32_0 : i32, i32
  }
  func.func @transform_5(%arg0: i32) -> (i32, i32, i32) {
    %c0_i32 = arith.constant 0 : i32
    %c0_i32_0 = arith.constant 0 : i32
    %c0_i32_1 = arith.constant 0 : i32
    return %arg0, %c0_i32, %c0_i32_0 : i32, i32, i32
  }
}

</mosaic_0001>

<llo_original>
// kernel: tpu_custom_call.1
$region0: #{tpu_custom_call.1}
  #allocation0 [shape = 'u32[]', space=smem, size = 0x4, offset = 0x4, fixed_abs, tag = 'smem constant byte address 0x4 - core index']
  #allocation1 [shape = 'u32[144,128]{1,0:T(1,128)}', space=vmem, size = 0x12000, scoped, tag = 'internal scratch']
  %s0 = inlined_call_operand.hbm [shape: f32[2,64,256], index: 0, kind: input, shape index: {}]
  %s1 = inlined_call_operand.vmem [shape: f32[64,4], index: 1, kind: input, shape index: {}]
  %s2 = inlined_call_operand.vmem [shape: f32[1,4], index: 2, kind: input, shape index: {}]
  %s3 = inlined_call_operand.vmem [shape: f32[4,64], index: 3, kind: input, shape index: {}]
  %s4 = inlined_call_operand.vmem [shape: f32[1,64], index: 4, kind: input, shape index: {}]
  %s5 = inlined_call_operand.hbm [shape: f32[2,64,256], index: 5, kind: output, shape index: {}]
  %s6 = sld [smem:[#allocation0]]
  $region57: #{tpu_custom_call.1} parent=0
    _
  %s8 = ssub.s32 1, %s6
  %s9 = scalar_select 0, %s8, %s6
  $region1: #{tpu_custom_call.1} parent=0
    #allocation2 [shape = 'u8[131072]{0}', space=vmem, size = 0x20000, scoped, tag = 'input window, operand 0']
    #allocation3 [shape = 's32[2]{0}', space=sflag, size = 0x8, scoped, tag = 'scoped memory for tpu_custom_call.1']
    #allocation4 [shape = 's32[2]{0}', space=sflag, size = 0x8, scoped, tag = 'scoped memory for tpu_custom_call.1']
    #allocation5 [shape = 'u8[131072]{0}', space=vmem, size = 0x20000, scoped, tag = 'output window, operand 0']
    %10 = vsyncpa [#allocation3], 0
    %s11 = scalar_lea.sflag [#allocation3], 1
    %12 = vsyncpa %s11, 0
    %13 = vsyncpa [#allocation4], 0
    %s14 = scalar_lea.sflag [#allocation4], 1
    %15 = vsyncpa %s14, 0
    loop: start=0, step=1, limit=4
    $region2: #{tpu_custom_call.1} parent=1 // loop_pre_header
      _
    $region3: #{tpu_custom_call.1} parent=1 // loop_header
      %s17 = sphi 0, %s21
      %p18 = scmp.ge.s32.totalorder %s17, 4
      %s27 = sphi 0, %s29
      %s30 = sphi 0, %s27
      %s31 = sphi 0, %s30
      %s47 = sphi 0, %s31
      %s51 = sphi 0, %s51
      %s53 = sphi 0, %s51
      %s54 = sphi 0, %s53
      %s68 = sphi 0, %s54
      %s72 = sphi 0, %s72
      %s74 = sphi 0, %s72
      %s75 = sphi 0, %s74
      %s89 = sphi 0, %s75
      %s93 = sphi 0, %s93
      %s95 = sphi 0, %s93
      %s96 = sphi 0, %s95
      %s110 = sphi 0, %s96
      %s114 = sphi 0, %s114
      %s116 = sphi 0, %s114
      %s117 = sphi 0, %s116
      %s131 = sphi 0, %s117
      %s137 = sphi 0, %s139
      %s140 = sphi 0, %s137
      %s141 = sphi 0, %s140
      %s157 = sphi 0, %s141
    $region4: #{tpu_custom_call.1} parent=1 // loop_header_branch
      %20 = sbr.rel (%p18) target = $region8
    $region5: #{tpu_custom_call.1} parent=1 // loop_body
      %s22 = ssub.s32 %s17, 1
      %s23 = ssub.s32 %s17, 2
      %s24 = sadd.s32 %s17, 1
      %s25 = ssub.s32 %s17, %s24
      %p26 = scmp.eq.s32.totalorder %s25, 0
      %s28 = sadd.s32 %s27, 1
      %s29 = scalar_select %p26, %s27, %s28
      %p32 = pneg %p26
      %p33 = scmp.eq.s32.totalorder %s17, 1
      %p34 = por %p32, %p33
      %p35 = scmp.ne.s32.totalorder %s27, %s30
      %p36 = scmp.eq.s32.totalorder %s17, 0
      %p37 = por %p35, %p36
      %p38 = scmp.ne.s32.totalorder %s27, %s30
      %p39 = scmp.eq.s32.totalorder %s22, 1
      %p40 = por %p38, %p39
      %p41 = scmp.ne.s32.totalorder %s30, %s31
      %p42 = scmp.eq.s32.totalorder %s22, 0
      %p43 = por %p41, %p42
      %p44 = scmp.ne.s32.totalorder %s30, %s31
      %p45 = scmp.eq.s32.totalorder %s23, 1
      %p46 = por %p44, %p45
      %p48 = scmp.ne.s32.totalorder %s31, %s47
      %p49 = scmp.eq.s32.totalorder %s23, 0
      %p50 = por %p48, %p49
      %s52 = sadd.s32 %s51, 1
      %p55 = scmp.eq.s32.totalorder %s17, 1
      %p56 = scmp.ne.s32.totalorder %s51, %s53
      %p57 = scmp.eq.s32.totalorder %s17, 0
      %p58 = por %p56, %p57
      %p59 = scmp.ne.s32.totalorder %s51, %s53
      %p60 = scmp.eq.s32.totalorder %s22, 1
      %p61 = por %p59, %p60
      %p62 = scmp.ne.s32.totalorder %s53, %s54
      %p63 = scmp.eq.s32.totalorder %s22, 0
      %p64 = por %p62, %p63
      %p65 = scmp.ne.s32.totalorder %s53, %s54
      %p66 = scmp.eq.s32.totalorder %s23, 1
      %p67 = por %p65, %p66
      %p69 = scmp.ne.s32.totalorder %s54, %s68
      %p70 = scmp.eq.s32.totalorder %s23, 0
      %p71 = por %p69, %p70
      %s73 = sadd.s32 %s72, 1
      %p76 = scmp.eq.s32.totalorder %s17, 1
      %p77 = scmp.ne.s32.totalorder %s72, %s74
      %p78 = scmp.eq.s32.totalorder %s17, 0
      %p79 = por %p77, %p78
      %p80 = scmp.ne.s32.totalorder %s72, %s74
      %p81 = scmp.eq.s32.totalorder %s22, 1
      %p82 = por %p80, %p81
      %p83 = scmp.ne.s32.totalorder %s74, %s75
      %p84 = scmp.eq.s32.totalorder %s22, 0
      %p85 = por %p83, %p84
      %p86 = scmp.ne.s32.totalorder %s74, %s75
      %p87 = scmp.eq.s32.totalorder %s23, 1
      %p88 = por %p86, %p87
      %p90 = scmp.ne.s32.totalorder %s75, %s89
      %p91 = scmp.eq.s32.totalorder %s23, 0
      %p92 = por %p90, %p91
      %s94 = sadd.s32 %s93, 1
      %p97 = scmp.eq.s32.totalorder %s17, 1
      %p98 = scmp.ne.s32.totalorder %s93, %s95
      %p99 = scmp.eq.s32.totalorder %s17, 0
      %p100 = por %p98, %p99
      %p101 = scmp.ne.s32.totalorder %s93, %s95
      %p102 = scmp.eq.s32.totalorder %s22, 1
      %p103 = por %p101, %p102
      %p104 = scmp.ne.s32.totalorder %s95, %s96
      %p105 = scmp.eq.s32.totalorder %s22, 0
      %p106 = por %p104, %p105
      %p107 = scmp.ne.s32.totalorder %s95, %s96
      %p108 = scmp.eq.s32.totalorder %s23, 1
      %p109 = por %p107, %p108
      %p111 = scmp.ne.s32.totalorder %s96, %s110
      %p112 = scmp.eq.s32.totalorder %s23, 0
      %p113 = por %p111, %p112
      %s115 = sadd.s32 %s114, 1
      %p118 = scmp.eq.s32.totalorder %s17, 1
      %p119 = scmp.ne.s32.totalorder %s114, %s116
      %p120 = scmp.eq.s32.totalorder %s17, 0
      %p121 = por %p119, %p120
      %p122 = scmp.ne.s32.totalorder %s114, %s116
      %p123 = scmp.eq.s32.totalorder %s22, 1
      %p124 = por %p122, %p123
      %p125 = scmp.ne.s32.totalorder %s116, %s117
      %p126 = scmp.eq.s32.totalorder %s22, 0
      %p127 = por %p125, %p126
      %p128 = scmp.ne.s32.totalorder %s116, %s117
      %p129 = scmp.eq.s32.totalorder %s23, 1
      %p130 = por %p128, %p129
      %p132 = scmp.ne.s32.totalorder %s117, %s131
      %p133 = scmp.eq.s32.totalorder %s23, 0
      %p134 = por %p132, %p133
      %s135 = ssub.s32 %s17, %s24
      %p136 = scmp.eq.s32.totalorder %s135, 0
      %s138 = sadd.s32 %s137, 1
      %s139 = scalar_select %p136, %s137, %s138
      %p142 = pneg %p136
      %p143 = scmp.eq.s32.totalorder %s17, 1
      %p144 = por %p142, %p143
      %p145 = scmp.ne.s32.totalorder %s137, %s140
      %p146 = scmp.eq.s32.totalorder %s17, 0
      %p147 = por %p145, %p146
      %p148 = scmp.ne.s32.totalorder %s137, %s140
      %p149 = scmp.eq.s32.totalorder %s22, 1
      %p150 = por %p148, %p149
      %p151 = scmp.ne.s32.totalorder %s140, %s141
      %p152 = scmp.eq.s32.totalorder %s22, 0
      %p153 = por %p151, %p152
      %p154 = scmp.ne.s32.totalorder %s140, %s141
      %p155 = scmp.eq.s32.totalorder %s23, 1
      %p156 = por %p154, %p155
      %p158 = scmp.ne.s32.totalorder %s141, %s157
      %p159 = scmp.eq.s32.totalorder %s23, 0
      %p160 = por %p158, %p159
      %p161 = scmp.le.s32.totalorder 1, %s17
      %p162 = scmp.lt.s32.totalorder %s17, 3
      %p163 = pnand %p161, %p162
      %p164 = pneg %p163
      // Predicated region
      $region9: #{tpu_custom_call.1} parent=5 // pred_check
        _
      $region10: #{tpu_custom_call.1} parent=5 // pred_check_branch
        %166 = sbr.rel (%p163) target = $region12
      $region11: #{tpu_custom_call.1} parent=5 // pred_region
        %s167 = ssub.s32 %s17, 1
        // Predicated region
        $region13: #{tpu_custom_call.1} parent=11 // pred_check
          %p168 = pneg %p64
        $region14: #{tpu_custom_call.1} parent=11 // pred_check_branch
          %170 = sbr.rel (%p168) target = $region16
        $region15: #{tpu_custom_call.1} parent=11 // pred_region
          _
        $region16: #{tpu_custom_call.1} parent=11 // pred_fallthru
          _
        // Predicated region
        $region17: #{tpu_custom_call.1} parent=11 // pred_check
          %p171 = pneg %p85
        $region18: #{tpu_custom_call.1} parent=11 // pred_check_branch
          %173 = sbr.rel (%p171) target = $region20
        $region19: #{tpu_custom_call.1} parent=11 // pred_region
          _
        $region20: #{tpu_custom_call.1} parent=11 // pred_fallthru
          _
        // Predicated region
        $region21: #{tpu_custom_call.1} parent=11 // pred_check
          %p174 = pneg %p106
        $region22: #{tpu_custom_call.1} parent=11 // pred_check_branch
          %176 = sbr.rel (%p174) target = $region24
        $region23: #{tpu_custom_call.1} parent=11 // pred_region
          _
        $region24: #{tpu_custom_call.1} parent=11 // pred_fallthru
          _
        // Predicated region
        $region25: #{tpu_custom_call.1} parent=11 // pred_check
          %p177 = pneg %p127
        $region26: #{tpu_custom_call.1} parent=11 // pred_check_branch
          %179 = sbr.rel (%p177) target = $region28
        $region27: #{tpu_custom_call.1} parent=11 // pred_region
          _
        $region28: #{tpu_custom_call.1} parent=11 // pred_fallthru
          _
      $region12: #{tpu_custom_call.1} parent=5 // pred_fallthru
        _
      %p180 = scmp.lt.s32.totalorder %s17, 2
      // Predicated region
      $region29: #{tpu_custom_call.1} parent=5 // pred_check
        %p181 = pneg %p180
      $region30: #{tpu_custom_call.1} parent=5 // pred_check_branch
        %183 = sbr.rel (%p181) target = $region32
      $region31: #{tpu_custom_call.1} parent=5 // pred_region
        // Predicated region
        $region33: #{tpu_custom_call.1} parent=31 // pred_check
          %p184 = pneg %p37
        $region34: #{tpu_custom_call.1} parent=31 // pred_check_branch
          %186 = sbr.rel (%p184) target = $region36
        $region35: #{tpu_custom_call.1} parent=31 // pred_region
          %s187 = sand.u32 %s27, 1
          %s188 = scalar_lea.sflag [#allocation3], %s187
          %s189 = sand.u32 %s27, 1
          %s190 = smul.addr %s189, 128
          %s191 = scalar_lea.vmem [#allocation2], %s190
          %s193 = ssub.s32 2048, 2048
          %194 = vsyncadd %s188, %s193
          %s195 = smul.addr %s17, 16
          %s196 = smul.addr %s195, 128
          %s197 = scalar_lea.hbm %s0, %s196
          %s198 = sshll.u32 %s191, 4
          %s199 = int_to_ptr.vmem [resolvable:$true] %s198
          %204 = dma.hbm_to_vmem [thread:$0]  %s197, 2048, %s199, %s188, 256, 256, 16
        $region36: #{tpu_custom_call.1} parent=31 // pred_fallthru
          _
      $region32: #{tpu_custom_call.1} parent=5 // pred_fallthru
        _
      %p205 = scmp.le.s32.totalorder 1, %s17
      %p206 = scmp.lt.s32.totalorder %s17, 3
      %p207 = pnand %p205, %p206
      %p208 = pneg %p207
      // Predicated region
      $region37: #{tpu_custom_call.1} parent=5 // pred_check
        _
      $region38: #{tpu_custom_call.1} parent=5 // pred_check_branch
        %210 = sbr.rel (%p207) target = $region40
      $region39: #{tpu_custom_call.1} parent=5 // pred_region
        %s211 = ssub.s32 %s17, 1
        %s212 = sand.u32 %s30, 1
        %s213 = scalar_lea.sflag [#allocation3], %s212
        %s214 = sand.u32 %s30, 1
        %s215 = smul.addr %s214, 128
        %s216 = scalar_lea.vmem [#allocation2], %s215
        // Predicated region
        $region41: #{tpu_custom_call.1} parent=39 // pred_check
          %p217 = pneg %p43
        $region42: #{tpu_custom_call.1} parent=39 // pred_check_branch
          %219 = sbr.rel (%p217) target = $region44
        $region43: #{tpu_custom_call.1} parent=39 // pred_region
          %220 = dma.done %s213, 2048
        $region44: #{tpu_custom_call.1} parent=39 // pred_fallthru
          _
        %s221 = sand.u32 %s30, 1
        %s222 = scalar_lea.sflag [#allocation3], %s221
        %s223 = sand.u32 %s30, 1
        %s224 = smul.addr %s223, 128
        %s225 = scalar_lea.vmem [#allocation2], %s224
        %p226 = pneg %p43
        %p227 = pneg %p40
        %p228 = pneg %p64
        %p229 = pneg %p61
        %p230 = pneg %p85
        %p231 = pneg %p82
        %p232 = pneg %p106
        %p233 = pneg %p103
        %p234 = pneg %p127
        %p235 = pneg %p124
        %p236 = pneg %p153
        %p237 = pneg %p150
        %s238 = sand.u32 %s140, 1
        %s239 = scalar_lea.sflag [#allocation4], %s238
        %s240 = sand.u32 %s140, 1
        %s241 = smul.addr %s240, 128
        %s242 = scalar_lea.vmem [#allocation5], %s241
        %v243 = vld [vmem:[%s216] sm:$0xff]
        %v244 = vld [vmem:[%s216 + $0x8] sm:$0xff]
        %v245 = vld [vmem:[%s216 + $0x10] sm:$0xff]
        %v246 = vld [vmem:[%s216 + $0x18] sm:$0xff]
        %v247 = vld [vmem:[%s216 + $0x20] sm:$0xff]
        %v248 = vld [vmem:[%s216 + $0x28] sm:$0xff]
        %v249 = vld [vmem:[%s216 + $0x30] sm:$0xff]
        %v250 = vld [vmem:[%s216 + $0x38] sm:$0xff]
        %v251 = vld [vmem:[%s216 + $0x40] sm:$0xff]
        %v252 = vld [vmem:[%s216 + $0x48] sm:$0xff]
        %v253 = vld [vmem:[%s216 + $0x50] sm:$0xff]
        %v254 = vld [vmem:[%s216 + $0x58] sm:$0xff]
        %v255 = vld [vmem:[%s216 + $0x60] sm:$0xff]
        %v256 = vld [vmem:[%s216 + $0x68] sm:$0xff]
        %v257 = vld [vmem:[%s216 + $0x70] sm:$0xff]
        %v258 = vld [vmem:[%s216 + $0x78] sm:$0xff]
        %v259 = vadd.f32 %v243, %v244
        %260 = vadd.xlane.f32.xlu0 %v259
        %v261 = vpop.xlane.xlu0 %260
        %v262 = vadd.f32 %v245, %v246
        %263 = vadd.xlane.f32.xlu0 %v262
        %v264 = vpop.xlane.xlu0 %263
        %v265 = vadd.f32 %v247, %v248
        %266 = vadd.xlane.f32.xlu0 %v265
        %v267 = vpop.xlane.xlu0 %266
        %v268 = vadd.f32 %v249, %v250
        %269 = vadd.xlane.f32.xlu0 %v268
        %v270 = vpop.xlane.xlu0 %269
        %v271 = vadd.f32 %v251, %v252
        %272 = vadd.xlane.f32.xlu0 %v271
        %v273 = vpop.xlane.xlu0 %272
        %v274 = vadd.f32 %v253, %v254
        %275 = vadd.xlane.f32.xlu0 %v274
        %v276 = vpop.xlane.xlu0 %275
        %v277 = vadd.f32 %v255, %v256
        %278 = vadd.xlane.f32.xlu0 %v277
        %v279 = vpop.xlane.xlu0 %278
        %v280 = vadd.f32 %v257, %v258
        %281 = vadd.xlane.f32.xlu0 %v280
        %v282 = vpop.xlane.xlu0 %281
        %v283 = vmul.f32 %v261, 0.00390625
        %v284 = vmul.f32 %v264, 0.00390625
        %v285 = vmul.f32 %v267, 0.00390625
        %v286 = vmul.f32 %v270, 0.00390625
        %v287 = vmul.f32 %v273, 0.00390625
        %v288 = vmul.f32 %v276, 0.00390625
        %v289 = vmul.f32 %v279, 0.00390625
        %v290 = vmul.f32 %v282, 0.00390625
        %v291 = vmax.f32 %v243, %v244
        %292 = vmax.xlane.f32.xlu0 %v291
        %v293 = vpop.xlane.xlu0 %292
        %v294 = vmax.f32 %v245, %v246
        %295 = vmax.xlane.f32.xlu0 %v294
        %v296 = vpop.xlane.xlu0 %295
        %v297 = vmax.f32 %v247, %v248
        %298 = vmax.xlane.f32.xlu0 %v297
        %v299 = vpop.xlane.xlu0 %298
        %v300 = vmax.f32 %v249, %v250
        %301 = vmax.xlane.f32.xlu0 %v300
        %v302 = vpop.xlane.xlu0 %301
        %v303 = vmax.f32 %v251, %v252
        %304 = vmax.xlane.f32.xlu0 %v303
        %v305 = vpop.xlane.xlu0 %304
        %v306 = vmax.f32 %v253, %v254
        %307 = vmax.xlane.f32.xlu0 %v306
        %v308 = vpop.xlane.xlu0 %307
        %v309 = vmax.f32 %v255, %v256
        %310 = vmax.xlane.f32.xlu0 %v309
        %v311 = vpop.xlane.xlu0 %310
        %v312 = vmax.f32 %v257, %v258
        %313 = vmax.xlane.f32.xlu0 %v312
        %v314 = vpop.xlane.xlu0 %313
        %v323 = vlaneseq
        %v324 = vand.u32 %v323, 127
        %v325 = vlaneseq
        %v326 = vshrl.u32 %v325, 7
        %v327 = vsub.s32 %v324, %v326
        %v328 = vrot.slane %v283, %v327
        %v329 = vadd.s32 %v324, 4294967288
        %v330 = vlaneseq
        %v331 = vshrl.u32 %v330, 7
        %v332 = vsub.s32 %v329, %v331
        %v333 = vrot.slane %v284, %v332
        %vm334 = vcmask 130112
        %v335 = vsel %vm334, %v333, %v328
        %v336 = vadd.s32 %v324, 4294967280
        %v337 = vlaneseq
        %v338 = vshrl.u32 %v337, 7
        %v339 = vsub.s32 %v336, %v338
        %v340 = vrot.slane %v285, %v339
        %vm341 = vcmask 195712
        %v342 = vsel %vm341, %v340, %v335
        %v343 = vadd.s32 %v324, 4294967272
        %v344 = vlaneseq
        %v345 = vshrl.u32 %v344, 7
        %v346 = vsub.s32 %v343, %v345
        %v347 = vrot.slane %v286, %v346
        %vm348 = vcmask 261312
        %v349 = vsel %vm348, %v347, %v342
        %v350 = vadd.s32 %v324, 4294967264
        %v351 = vlaneseq
        %v352 = vshrl.u32 %v351, 7
        %v353 = vsub.s32 %v350, %v352
        %v354 = vrot.slane %v287, %v353
        %vm355 = vcmask 326912
        %v356 = vsel %vm355, %v354, %v349
        %v357 = vadd.s32 %v324, 4294967256
        %v358 = vlaneseq
        %v359 = vshrl.u32 %v358, 7
        %v360 = vsub.s32 %v357, %v359
        %v361 = vrot.slane %v288, %v360
        %vm362 = vcmask 392512
        %v363 = vsel %vm362, %v361, %v356
        %v364 = vadd.s32 %v324, 4294967248
        %v365 = vlaneseq
        %v366 = vshrl.u32 %v365, 7
        %v367 = vsub.s32 %v364, %v366
        %v368 = vrot.slane %v289, %v367
        %vm369 = vcmask 458112
        %v370 = vsel %vm369, %v368, %v363
        %v371 = vadd.s32 %v324, 4294967240
        %v372 = vlaneseq
        %v373 = vshrl.u32 %v372, 7
        %v374 = vsub.s32 %v371, %v373
        %v375 = vrot.slane %v290, %v374
        %vm376 = vcmask 523712
        %v377 = vsel %vm376, %v375, %v370
        %v387 = vlaneseq
        %v388 = vshrl.u32 %v387, 7
        %v389 = vsub.s32 %v324, %v388
        %v390 = vrot.slane %v293, %v389
        %v391 = vlaneseq
        %v392 = vshrl.u32 %v391, 7
        %v393 = vsub.s32 %v329, %v392
        %v394 = vrot.slane %v296, %v393
        %v395 = vsel %vm334, %v394, %v390
        %v396 = vlaneseq
        %v397 = vshrl.u32 %v396, 7
        %v398 = vsub.s32 %v336, %v397
        %v399 = vrot.slane %v299, %v398
        %v400 = vsel %vm341, %v399, %v395
        %v401 = vlaneseq
        %v402 = vshrl.u32 %v401, 7
        %v403 = vsub.s32 %v343, %v402
        %v404 = vrot.slane %v302, %v403
        %v405 = vsel %vm348, %v404, %v400
        %v406 = vlaneseq
        %v407 = vshrl.u32 %v406, 7
        %v408 = vsub.s32 %v350, %v407
        %v409 = vrot.slane %v305, %v408
        %v410 = vsel %vm355, %v409, %v405
        %v411 = vlaneseq
        %v412 = vshrl.u32 %v411, 7
        %v413 = vsub.s32 %v357, %v412
        %v414 = vrot.slane %v308, %v413
        %v415 = vsel %vm362, %v414, %v410
        %v416 = vlaneseq
        %v417 = vshrl.u32 %v416, 7
        %v418 = vsub.s32 %v364, %v417
        %v419 = vrot.slane %v311, %v418
        %v420 = vsel %vm369, %v419, %v415
        %v421 = vlaneseq
        %v422 = vshrl.u32 %v421, 7
        %v423 = vsub.s32 %v371, %v422
        %v424 = vrot.slane %v314, %v423
        %v425 = vsel %vm376, %v424, %v420
        %vm427 = vcmask 1040384
        %v428 = vsel %vm427, %v377, %v425
        %v429 = vld [vmem:[%s1] sm:$0xff]
        %v430 = vld [vmem:[%s1 + $0x8] sm:$0xff]
        %v431 = vld [vmem:[%s1 + $0x10] sm:$0xff]
        %v432 = vld [vmem:[%s1 + $0x18] sm:$0xff]
        %v433 = vld [vmem:[%s1 + $0x20] sm:$0xff]
        %v434 = vld [vmem:[%s1 + $0x28] sm:$0xff]
        %v435 = vld [vmem:[%s1 + $0x30] sm:$0xff]
        %v436 = vld [vmem:[%s1 + $0x38] sm:$0xff]
        %v437 = vld [vmem:[%s2] sm:$0x1]
        %v439 = vlaneseq
        %v440 = vshrl.u32 %v439, 7
        %v441 = vsub.s32 0, %v440
        %v442 = vrot.slane %v437, %v441
        %vm444 = vcmask 523264
        %v446 = vsel %vm444, %v428, 0
        %448 = vmatprep.subr.mxu0 0.0
        %449 = vmatpush1.msra.mxu0 %v429
        %450 = vmatprep.subr.mxu0 0.0
        %451 = vmatpush1.msra.mxu0 %v430
        %452 = vmatprep.subr.mxu0 0.0
        %453 = vmatpush1.msra.mxu0 %v431
        %454 = vmatprep.subr.mxu0 0.0
        %455 = vmatpush1.msra.mxu0 %v432
        %456 = vmatprep.subr.mxu0 0.0
        %457 = vmatpush1.msra.mxu0 %v433
        %458 = vmatprep.subr.mxu0 0.0
        %459 = vmatpush1.msra.mxu0 %v434
        %460 = vmatprep.subr.mxu0 0.0
        %461 = vmatpush1.msra.mxu0 %v435
        %462 = vmatprep.subr.mxu0 0.0
        %463 = vmatpush1.msra.mxu0 %v436
        %464 = vmatprep.subr.mxu0 0.0
        %465 = vmatpush1.msra.mxu0 0.0
        %466 = vmatprep.subr.mxu0 0.0
        %467 = vmatpush1.msra.mxu0 0.0
        %468 = vmatprep.subr.mxu0 0.0
        %469 = vmatpush1.msra.mxu0 0.0
        %470 = vmatprep.subr.mxu0 0.0
        %471 = vmatpush1.msra.mxu0 0.0
        %472 = vmatprep.subr.mxu0 0.0
        %473 = vmatpush1.msra.mxu0 0.0
        %474 = vmatprep.subr.mxu0 0.0
        %475 = vmatpush1.msra.mxu0 0.0
        %476 = vmatprep.subr.mxu0 0.0
        %477 = vmatpush1.msra.mxu0 0.0
        %478 = vmatprep.subr.mxu0 0.0
        %479 = vmatpush1.msra.mxu0 0.0
        %480 = vmatprep.subr.mxu0 0.0
        %481 = vmatpush1.msra.mxu0 0.0
        %482 = vmatprep.subr.mxu0 0.0
        %483 = vmatpush1.msra.mxu0 0.0
        %484 = vmatprep.subr.mxu0 0.0
        %485 = vmatpush1.msra.mxu0 0.0
        %486 = vmatprep.subr.mxu0 0.0
        %487 = vmatpush1.msra.mxu0 0.0
        %488 = vmatprep.subr.mxu0 0.0
        %489 = vmatpush1.msra.mxu0 0.0
        %490 = vmatprep.subr.mxu0 0.0
        %491 = vmatpush1.msra.mxu0 0.0
        %492 = vmatprep.subr.mxu0 0.0
        %493 = vmatpush1.msra.mxu0 0.0
        %494 = vmatprep.subr.mxu0 0.0
        %495 = vmatpush1.msra.mxu0 0.0
        %496 = vmatprep.subr.mxu0 0.0
        %497 = vmatpush1.msra.mxu0 0.0
        %498 = vmatprep.subr.mxu0 0.0
        %499 = vmatpush1.msra.mxu0 0.0
        %500 = vmatprep.subr.mxu0 0.0
        %501 = vmatpush1.msra.mxu0 0.0
        %502 = vmatprep.subr.mxu0 0.0
        %503 = vmatpush1.msra.mxu0 0.0
        %504 = vmatprep.subr.mxu0 0.0
        %505 = vmatpush1.msra.mxu0 0.0
        %506 = vmatprep.subr.mxu0 0.0
        %507 = vmatpush1.msra.mxu0 0.0
        %508 = vmatprep.subr.mxu0 0.0
        %509 = vmatpush1.msra.mxu0 0.0
        %510 = vmatprep.subr.mxu0 0.0
        %511 = vmatpush1.msra.mxu0 0.0
        %512 = vmatprep.mubr.f32.mxu0 0.0
        %513 = vmatmul.mubr.f32.gmra.mrb[0].mxu0 %v446
        %v514 = vpop.f32.mrb[0].mxu0
        %v515 = vadd.f32 %v442, %v514
        %v516 = vpop.f32.mrb[0].mxu0
        %517 = vdwg.mxu0
        %v518 = vmax.f32 %v515, 0.0
        %v520 = vrot.slane %v518, 1
        %v522 = vadd.f32 %v518, %v520
        %v523 = vld [vmem:[%s3] sm:$0xf]
        %v524 = vld [vmem:[%s4] sm:$0x1]
        %v525 = vmul.f32 %v524, 2.0
        %vm526 = vcmask 31744
        %v528 = vsel %vm526, %v522, 0
        %vm530 = vcmask 1043456
        %v532 = vsel %vm530, %v523, 0
        %534 = vmatprep.subr.mxu0 0.0
        %535 = vmatpush1.msra.mxu0 %v532
        %536 = vmatprep.subr.mxu0 0.0
        %537 = vmatpush1.msra.mxu0 0.0
        %538 = vmatprep.subr.mxu0 0.0
        %539 = vmatpush1.msra.mxu0 0.0
        %540 = vmatprep.subr.mxu0 0.0
        %541 = vmatpush1.msra.mxu0 0.0
        %542 = vmatprep.subr.mxu0 0.0
        %543 = vmatpush1.msra.mxu0 0.0
        %544 = vmatprep.subr.mxu0 0.0
        %545 = vmatpush1.msra.mxu0 0.0
        %546 = vmatprep.subr.mxu0 0.0
        %547 = vmatpush1.msra.mxu0 0.0
        %548 = vmatprep.subr.mxu0 0.0
        %549 = vmatpush1.msra.mxu0 0.0
        %550 = vmatprep.subr.mxu0 0.0
        %551 = vmatpush1.msra.mxu0 0.0
        %552 = vmatprep.subr.mxu0 0.0
        %553 = vmatpush1.msra.mxu0 0.0
        %554 = vmatprep.subr.mxu0 0.0
        %555 = vmatpush1.msra.mxu0 0.0
        %556 = vmatprep.subr.mxu0 0.0
        %557 = vmatpush1.msra.mxu0 0.0
        %558 = vmatprep.subr.mxu0 0.0
        %559 = vmatpush1.msra.mxu0 0.0
        %560 = vmatprep.subr.mxu0 0.0
        %561 = vmatpush1.msra.mxu0 0.0
        %562 = vmatprep.subr.mxu0 0.0
        %563 = vmatpush1.msra.mxu0 0.0
        %564 = vmatprep.subr.mxu0 0.0
        %565 = vmatpush1.msra.mxu0 0.0
        %566 = vmatprep.subr.mxu0 0.0
        %567 = vmatpush1.msra.mxu0 0.0
        %568 = vmatprep.subr.mxu0 0.0
        %569 = vmatpush1.msra.mxu0 0.0
        %570 = vmatprep.subr.mxu0 0.0
        %571 = vmatpush1.msra.mxu0 0.0
        %572 = vmatprep.subr.mxu0 0.0
        %573 = vmatpush1.msra.mxu0 0.0
        %574 = vmatprep.subr.mxu0 0.0
        %575 = vmatpush1.msra.mxu0 0.0
        %576 = vmatprep.subr.mxu0 0.0
        %577 = vmatpush1.msra.mxu0 0.0
        %578 = vmatprep.subr.mxu0 0.0
        %579 = vmatpush1.msra.mxu0 0.0
        %580 = vmatprep.subr.mxu0 0.0
        %581 = vmatpush1.msra.mxu0 0.0
        %582 = vmatprep.subr.mxu0 0.0
        %583 = vmatpush1.msra.mxu0 0.0
        %584 = vmatprep.subr.mxu0 0.0
        %585 = vmatpush1.msra.mxu0 0.0
        %586 = vmatprep.subr.mxu0 0.0
        %587 = vmatpush1.msra.mxu0 0.0
        %588 = vmatprep.subr.mxu0 0.0
        %589 = vmatpush1.msra.mxu0 0.0
        %590 = vmatprep.subr.mxu0 0.0
        %591 = vmatpush1.msra.mxu0 0.0
        %592 = vmatprep.subr.mxu0 0.0
        %593 = vmatpush1.msra.mxu0 0.0
        %594 = vmatprep.subr.mxu0 0.0
        %595 = vmatpush1.msra.mxu0 0.0
        %596 = vmatprep.subr.mxu0 0.0
        %597 = vmatpush1.msra.mxu0 0.0
        %598 = vmatprep.mubr.f32.mxu0 0.0
        %599 = vmatmul.mubr.f32.gmra.mrb[0].mxu0 %v528
        %v600 = vpop.f32.mrb[0].mxu0
        %v601 = vadd.f32 %v525, %v600
        %v602 = vpop.f32.mrb[0].mxu0
        %603 = vdwg.mxu0
        %v604 = vsub.f32 0.0, %v601
        %v605 = vmul.f32 %v604, 1.442695
        %v606 = vpow.pop %v605
        %v607 = vadd.f32 %v606, 1.0
        %v608 = vrcp.pop %v607
        %v609 = vmul.f32 1.0, %v608
        %v610 = vlaneseq
        %v611 = vshrl.u32 %v610, 7
        %v612 = vsub.s32 0, %v611
        %v613 = vrot.slane %v609, %v612
        %615 = vbcast.lane.b32.xlu0 %v613, 256
        %v616 = vpop.permute.xlu0 %615
        %s618 = sor.u32 256, 8
        %619 = vbcast.lane.b32.xlu0 %v613, %s618
        %v620 = vpop.permute.xlu0 %619
        %s622 = sor.u32 256, 16
        %623 = vbcast.lane.b32.xlu0 %v613, %s622
        %v624 = vpop.permute.xlu0 %623
        %s626 = sor.u32 256, 24
        %627 = vbcast.lane.b32.xlu0 %v613, %s626
        %v628 = vpop.permute.xlu0 %627
        %s630 = sor.u32 256, 32
        %631 = vbcast.lane.b32.xlu0 %v613, %s630
        %v632 = vpop.permute.xlu0 %631
        %s634 = sor.u32 256, 40
        %635 = vbcast.lane.b32.xlu0 %v613, %s634
        %v636 = vpop.permute.xlu0 %635
        %s638 = sor.u32 256, 48
        %639 = vbcast.lane.b32.xlu0 %v613, %s638
        %v640 = vpop.permute.xlu0 %639
        %s642 = sor.u32 256, 56
        %643 = vbcast.lane.b32.xlu0 %v613, %s642
        %v644 = vpop.permute.xlu0 %643
        %v645 = vmul.f32 %v243, %v616
        %v646 = vmul.f32 %v244, %v616
        %v647 = vmul.f32 %v245, %v620
        %v648 = vmul.f32 %v246, %v620
        %v649 = vmul.f32 %v247, %v624
        %v650 = vmul.f32 %v248, %v624
        %v651 = vmul.f32 %v249, %v628
        %v652 = vmul.f32 %v250, %v628
        %v653 = vmul.f32 %v251, %v632
        %v654 = vmul.f32 %v252, %v632
        %v655 = vmul.f32 %v253, %v636
        %v656 = vmul.f32 %v254, %v636
        %v657 = vmul.f32 %v255, %v640
        %v658 = vmul.f32 %v256, %v640
        %v659 = vmul.f32 %v257, %v644
        %v660 = vmul.f32 %v258, %v644
        %661 = vst [vmem:[%s242] sm:$0xff] %v645
        %662 = vst [vmem:[%s242 + $0x8] sm:$0xff] %v646
        %663 = vst [vmem:[%s242 + $0x10] sm:$0xff] %v647
        %664 = vst [vmem:[%s242 + $0x18] sm:$0xff] %v648
        %665 = vst [vmem:[%s242 + $0x20] sm:$0xff] %v649
        %666 = vst [vmem:[%s242 + $0x28] sm:$0xff] %v650
        %667 = vst [vmem:[%s242 + $0x30] sm:$0xff] %v651
        %668 = vst [vmem:[%s242 + $0x38] sm:$0xff] %v652
        %669 = vst [vmem:[%s242 + $0x40] sm:$0xff] %v653
        %670 = vst [vmem:[%s242 + $0x48] sm:$0xff] %v654
        %671 = vst [vmem:[%s242 + $0x50] sm:$0xff] %v655
        %672 = vst [vmem:[%s242 + $0x58] sm:$0xff] %v656
        %673 = vst [vmem:[%s242 + $0x60] sm:$0xff] %v657
        %674 = vst [vmem:[%s242 + $0x68] sm:$0xff] %v658
        %675 = vst [vmem:[%s242 + $0x70] sm:$0xff] %v659
        %676 = vst [vmem:[%s242 + $0x78] sm:$0xff] %v660
        %s677 = sand.u32 %s140, 1
        %s678 = scalar_lea.sflag [#allocation4], %s677
        %s679 = sand.u32 %s140, 1
        %s680 = smul.addr %s679, 128
        %s681 = scalar_lea.vmem [#allocation5], %s680
        // Predicated region
        $region45: #{tpu_custom_call.1} parent=39 // pred_check
          %p682 = pneg %p150
        $region46: #{tpu_custom_call.1} parent=39 // pred_check_branch
          %684 = sbr.rel (%p682) target = $region48
        $region47: #{tpu_custom_call.1} parent=39 // pred_region
          %s686 = ssub.s32 2048, 2048
          %687 = vsyncadd %s678, %s686
          %s688 = smul.addr %s22, 16
          %s689 = smul.addr %s688, 128
          %s690 = scalar_lea.hbm %s5, %s689
          %s691 = sshll.u32 %s681, 4
          %s692 = int_to_ptr.vmem [resolvable:$true] %s691
          %697 = dma.vmem_to_hbm [thread:$0]  %s692, 2048, %s690, %s678, 256, 256, 16
        $region48: #{tpu_custom_call.1} parent=39 // pred_fallthru
          _
      $region40: #{tpu_custom_call.1} parent=5 // pred_fallthru
        _
      %p698 = scmp.le.s32.totalorder 2, %s17
      // Predicated region
      $region49: #{tpu_custom_call.1} parent=5 // pred_check
        %p699 = pneg %p698
      $region50: #{tpu_custom_call.1} parent=5 // pred_check_branch
        %701 = sbr.rel (%p699) target = $region52
      $region51: #{tpu_custom_call.1} parent=5 // pred_region
        %s702 = ssub.s32 %s17, 2
        // Predicated region
        $region53: #{tpu_custom_call.1} parent=51 // pred_check
          %p703 = pneg %p156
        $region54: #{tpu_custom_call.1} parent=51 // pred_check_branch
          %705 = sbr.rel (%p703) target = $region56
        $region55: #{tpu_custom_call.1} parent=51 // pred_region
          %s706 = sand.u32 %s141, 1
          %s707 = scalar_lea.sflag [#allocation4], %s706
          %s708 = sand.u32 %s141, 1
          %s709 = smul.addr %s708, 128
          %s710 = scalar_lea.vmem [#allocation5], %s709
          %711 = dma.done %s707, 2048
        $region56: #{tpu_custom_call.1} parent=51 // pred_fallthru
          _
      $region52: #{tpu_custom_call.1} parent=5 // pred_fallthru
        _
    $region6: #{tpu_custom_call.1} parent=1 // loop_footer
      %s21 = sadd.s32 1, %s17
    $region7: #{tpu_custom_call.1} parent=1 // loop_footer_branch
      %16 = sbr.rel target = $region3
    $region8: #{tpu_custom_call.1} parent=1 // loop_exit
      _
    %712 = vsyncpa [#allocation3], 1
    %s713 = scalar_lea.sflag [#allocation3], 1
    %714 = vsyncpa %s713, 1
    %715 = vsyncpa [#allocation4], 1
    %s716 = scalar_lea.sflag [#allocation4], 1
    %717 = vsyncpa %s716, 1

</llo_original>
